<compile_context>
chip_gen: v5e
topology: v5e:2x2
jax: 0.10.0
libtpu: 0.0.40
codegen_flags: <defaults>
</compile_context>

<pallas_src>
import functools

import jax
import jax.numpy as jnp
from jax.experimental import pallas as pl
from jax.experimental.pallas import tpu as pltpu

G_SIZE = 4            # |C4| -- feature / hidden representation size
V_SIZE = 2            # 2D vector representation size
N_ACTIONS = 2         # P4toTraffic output representation size
HEAD_OUT = N_ACTIONS + 1   # fc4 (2 policy logits) + fc5 (1 value), fused

LANE = 128
SUBLANE = 8
_HIGH = jax.lax.Precision.HIGHEST


def _round_up(x, m):
    return ((x + m - 1) // m) * m


def _cdiv(a, b):
    return (a + b - 1) // b


# ----------------------------------------------------------------------------
# Generation-aware knobs (cached)
# ----------------------------------------------------------------------------
_HW = {}


def _hw_knobs():
    if not _HW:
        try:
            phys = int(pltpu.get_tpu_info().vmem_capacity_bytes)
        except Exception:
            phys = 64 << 20                       # conservative (v7x per-core VMEM)
        # Explicit scoped-VMEM limit: above the 16/32 MiB defaults, below physical.
        _HW["vmem_limit"] = int(min(phys * 0.8, 112 << 20))
        # Bigger row tiles where 128 MiB VMEM allows (v5e/v6e), conservative on v7x.
        _HW["max_tile_rows"] = 2048 if phys >= (96 << 20) else 1024
    return _HW["vmem_limit"], _HW["max_tile_rows"]


def _choose_row_tiling(m, max_tile_rows):
    """Row tile TM and padded rows Mp: TM divides Mp evenly, >=2 tiles when rows allow
    (so ("parallel",) can shard row tiles across v7x's 2 TensorCores)."""
    m8 = _round_up(max(m, 1), SUBLANE)
    n_tiles = _cdiv(m8, max_tile_rows)
    if m8 > SUBLANE:
        n_tiles = max(n_tiles, 2)
    tm = _round_up(_cdiv(m8, n_tiles), SUBLANE)
    mp = tm * _cdiv(m8, tm)
    return tm, mp


def _pad2d(x, rows, cols, dtype):
    r, c = x.shape
    if r == rows and c == cols and x.dtype == dtype:
        return x                                  # already padded + cast: no extra copy
    return jnp.zeros((rows, cols), dtype).at[:r, :c].set(x.astype(dtype))


# ----------------------------------------------------------------------------
# Pallas kernels
# ----------------------------------------------------------------------------
def _graph_layer_kernel(x_ref, w_ref, off_ref, o_ref, *, scale):
    # x_ref  : (TM, Kp)  operand dtype (bf16 or f32)
    # w_ref  : (Kp, Pp)  operand dtype, resident across the row-tile grid
    # off_ref: (TM, Pp)  f32 per-row epilogue offset (d-term + f_sum-term + N*bias)
    # o_ref  : (TM, Pp)  operand dtype (bf16 intermediates)
    acc = jnp.dot(x_ref[...], w_ref[...], preferred_element_type=jnp.float32)
    o_ref[...] = jnp.maximum(scale * acc + off_ref[...], 0.0).astype(o_ref.dtype)


def _graph_layer_head_kernel(x_ref, w_ref, off_ref, wh_ref, bh_ref, h_ref, *, scale):
    # Last graph layer with fc4/fc5 fused into the epilogue: the layer activation is
    # never written back to HBM; only the (TM, 128) head slab is stored (f32).
    acc = jnp.dot(x_ref[...], w_ref[...], preferred_element_type=jnp.float32)
    act = jnp.maximum(scale * acc + off_ref[...], 0.0)
    h_ref[...] = jnp.dot(act.astype(wh_ref.dtype), wh_ref[...],
                         preferred_element_type=jnp.float32) + bh_ref[...]


def _call_graph_layer(x_pad, w_pad, off_pad, *, scale, tm, out_dtype):
    mp, kp = x_pad.shape
    _, pp = w_pad.shape
    vmem_limit, _ = _hw_knobs()
    return pl.pallas_call(
        functools.partial(_graph_layer_kernel, scale=scale),
        out_shape=jax.ShapeDtypeStruct((mp, pp), out_dtype),
        grid_spec=pltpu.PrefetchScalarGridSpec(
            num_scalar_prefetch=0,
            grid=(mp // tm,),
            in_specs=[
                pl.BlockSpec((tm, kp), lambda i: (i, 0)),
                pl.BlockSpec((kp, pp), lambda i: (0, 0)),   # resident weight
                pl.BlockSpec((tm, pp), lambda i: (i, 0)),   # per-row f32 offset
            ],
            out_specs=pl.BlockSpec((tm, pp), lambda i: (i, 0)),
        ),
        compiler_params=pltpu.CompilerParams(
            dimension_semantics=("parallel",),
            vmem_limit_bytes=vmem_limit,
        ),
    )(x_pad, w_pad, off_pad)


def _call_graph_layer_with_head(x_pad, w_pad, off_pad, wh_pad, bh_pad, *, scale, tm):
    mp, kp = x_pad.shape
    _, pp = w_pad.shape
    hpp = wh_pad.shape[1]
    vmem_limit, _ = _hw_knobs()
    return pl.pallas_call(
        functools.partial(_graph_layer_head_kernel, scale=scale),
        out_shape=jax.ShapeDtypeStruct((mp, hpp), jnp.float32),
        grid_spec=pltpu.PrefetchScalarGridSpec(
            num_scalar_prefetch=0,
            grid=(mp // tm,),
            in_specs=[
                pl.BlockSpec((tm, kp), lambda i: (i, 0)),
                pl.BlockSpec((kp, pp), lambda i: (0, 0)),   # resident layer weight
                pl.BlockSpec((tm, pp), lambda i: (i, 0)),   # per-row f32 offset
                pl.BlockSpec((pp, hpp), lambda i: (0, 0)),  # resident fused head weight
                pl.BlockSpec((1, hpp), lambda i: (0, 0)),   # resident head bias
            ],
            out_specs=pl.BlockSpec((tm, hpp), lambda i: (i, 0)),
        ),
        compiler_params=pltpu.CompilerParams(
            dimension_semantics=("parallel",),
            vmem_limit_bytes=vmem_limit,
        ),
    )(x_pad, w_pad, off_pad, wh_pad, bh_pad)


# ----------------------------------------------------------------------------
# One-time weight packing (split by column block, transpose, pad, cast)
# ----------------------------------------------------------------------------
def pack_params(params, operand_dtype=jnp.bfloat16):
    repr_in = 2 * G_SIZE + V_SIZE                 # 10 (double_in=True direct sum)
    packed = {"operand_dtype": operand_dtype, "layers": []}
    for (W, b) in params["layers"]:
        P, K10 = W.shape
        C = K10 // repr_in
        W3 = W.reshape(P, C, repr_in)
        Wfi = W3[:, :, :G_SIZE].reshape(P, C * G_SIZE)            # receiver f_i block
        Wd = jnp.sum(W3[:, :, G_SIZE:G_SIZE + V_SIZE], axis=1)    # (P, 2): d broadcast over c
        Wfj = W3[:, :, G_SIZE + V_SIZE:].reshape(P, C * G_SIZE)   # sender f_j block
        K = C * G_SIZE
        Kp, Pp = _round_up(K, LANE), _round_up(P, LANE)
        w_pad = jnp.zeros((Kp, Pp), operand_dtype).at[:K, :P].set(
            jnp.transpose(Wfi).astype(operand_dtype))
        packed["layers"].append(dict(
            w_pad=w_pad,                                          # MXU operand
            wd_t=jnp.transpose(Wd).astype(jnp.float32),           # (2, P)  f32, wrapper side
            wfj_t=jnp.transpose(Wfj).astype(jnp.float32),         # (K, P)  f32, wrapper side
            bias=b.astype(jnp.float32),                           # (P,)
            K=K, P=P, Kp=Kp, Pp=Pp,
        ))
    (W4, b4), (W5, b5) = params["fc4"], params["fc5"]
    Wh = jnp.concatenate([W4, W5], axis=0)        # (3, CF)
    bh = jnp.concatenate([b4, b5], axis=0)        # (3,)
    CF = Wh.shape[1]
    Pp_last = _round_up(CF, LANE)
    HPp = _round_up(HEAD_OUT, LANE)
    packed["head"] = dict(
        wh_pad=jnp.zeros((Pp_last, HPp), operand_dtype).at[:CF, :HEAD_OUT].set(
            jnp.transpose(Wh).astype(operand_dtype)),
        bh_pad=jnp.zeros((1, HPp), jnp.float32).at[0, :HEAD_OUT].set(bh.astype(jnp.float32)),
    )
    return packed


# ----------------------------------------------------------------------------
# Forward
# ----------------------------------------------------------------------------
def basis_traffic_coordinator_forward(locs, states, packed, thresh_vec=(1.0, 1.0)):
    del thresh_vec          # norms/adjacency block is dead in the reconstructed semantics
    B, N, _ = locs.shape
    _, _, C0, G = states.shape
    assert G == G_SIZE
    layers = packed["layers"]
    assert len(layers) >= 1
    od = packed["operand_dtype"]

    M = B * N
    _, max_tile_rows = _hw_knobs()
    TM, Mp = _choose_row_tiling(M, max_tile_rows)
    scale = float(N)        # applied in f32 inside the kernel epilogue (not to bf16 x)

    # sum_j (loc_i - loc_j) == N*loc_i - sum_j loc_j  -> no N x N diffs tensor needed.
    d_sum = (jnp.float32(N) * locs - jnp.sum(locs, axis=1, keepdims=True)).reshape(M, V_SIZE)

    x_flat = states.reshape(M, C0 * G_SIZE).astype(jnp.float32)
    f_sum = jnp.sum(states.astype(jnp.float32), axis=1).reshape(B, C0 * G_SIZE)
    x_pad = _pad2d(x_flat, Mp, layers[0]["Kp"], od)

    head_pad = None
    n_layers = len(layers)
    for l, lp in enumerate(layers):
        P, Pp = lp["P"], lp["Pp"]
        assert x_pad.shape[1] == lp["Kp"]
        # Per-row epilogue offset: W_d @ sum_j d_ij + W_fj @ sum_j f_j + N*b  (f32, tiny matmuls)
        d_contrib = jnp.dot(d_sum, lp["wd_t"], precision=_HIGH).reshape(B, N, P)
        f_contrib = jnp.dot(f_sum, lp["wfj_t"], precision=_HIGH) + scale * lp["bias"]
        off = (d_contrib + f_contrib[:, None, :]).reshape(M, P)
        off_pad = _pad2d(off, Mp, Pp, jnp.float32)   # zero-padded rows/cols -> relu(0)=0

        if l < n_layers - 1:
            out_pad = _call_graph_layer(x_pad, lp["w_pad"], off_pad,
                                        scale=scale, tm=TM, out_dtype=od)
            # Next-layer inputs: the padded bf16 output feeds straight in (Kp_next == Pp,
            # padded rows/cols are exact zeros); f_sum over agents from the valid region.
            st = out_pad[:M, :P].astype(jnp.float32).reshape(B, N, P)
            f_sum = jnp.sum(st, axis=1)
            x_pad = out_pad
        else:
            head_pad = _call_graph_layer_with_head(
                x_pad, lp["w_pad"], off_pad,
                packed["head"]["wh_pad"], packed["head"]["bh_pad"],
                scale=scale, tm=TM)

    head = head_pad[:M, :HEAD_OUT].reshape(B, N, HEAD_OUT)
    return head[..., :N_ACTIONS], head[..., N_ACTIONS:]


# ----------------------------------------------------------------------------
# Deterministic synthetic parameter init (shapes follow the torch __init__)
# ----------------------------------------------------------------------------
def init_params(key, input_size, hidden_sizes):
    params = {"layers": []}
    c_in = input_size
    for h in hidden_sizes:
        c_out = int(h / (4 ** 0.5))                  # channel / sqrt(|group|)
        k_in = c_in * (2 * G_SIZE + V_SIZE)          # direct-sum repr (double_in=True)
        k_out = c_out * G_SIZE
        key, k1, k2 = jax.random.split(key, 3)
        scale = (2.0 / (k_in + k_out)) ** 0.5        # xavier-like gain
        W = scale * jax.random.normal(k1, (k_out, k_in), jnp.float32)
        b = 0.1 * jax.random.normal(k2, (k_out,), jnp.float32)   # bias_init=True
        params["layers"].append((W, b))
        c_in = c_out

    cf = c_in * G_SIZE
    key, k1, k2, k3, k4 = jax.random.split(key, 5)
    s4 = (2.0 / (cf + N_ACTIONS)) ** 0.5
    s5 = (2.0 / (cf + 1)) ** 0.5
    params["fc4"] = (s4 * jax.random.normal(k1, (N_ACTIONS, cf), jnp.float32),
                     0.1 * jax.random.normal(k2, (N_ACTIONS,), jnp.float32))
    params["fc5"] = (s5 * jax.random.normal(k3, (1, cf), jnp.float32),
                     0.1 * jax.random.normal(k4, (1,), jnp.float32))
    return params


# ----------------------------------------------------------------------------
# Pure-JAX reference (explicit per-message form) to validate the algebraic collapse
# ----------------------------------------------------------------------------
def reference_forward(locs, states, params):
    diffs = locs[:, :, None, :] - locs[:, None, :, :]
    st = states
    for (W, b) in params["layers"]:
        B, N, C, G = st.shape
        f_i = jnp.broadcast_to(st[:, :, None, :, :], (B, N, N, C, G))
        f_j = jnp.broadcast_to(st[:, None, :, :, :], (B, N, N, C, G))
        d = jnp.broadcast_to(diffs[:, :, :, None, :], (B, N, N, C, V_SIZE))
        x = jnp.concatenate([f_i, d, f_j], axis=-1).reshape(B, N, N, -1)
        y = jnp.einsum("bijk,pk->bijp", x, W, precision=_HIGH) + b
        st = jax.nn.relu(jnp.sum(y, axis=2)).reshape(B, N, -1, G)
    B, N, C, G = st.shape
    flat = st.reshape(B, N, C * G)
    pol = jnp.einsum("bnk,ak->bna", flat, params["fc4"][0], precision=_HIGH) + params["fc4"][1]
    val = jnp.einsum("bnk,ak->bna", flat, params["fc5"][0], precision=_HIGH) + params["fc5"][1]
    return pol, val


if __name__ == "__main__":
    B, N = 2, 4                 # batch, agents
    input_size = 3              # input channels of the first BasisLinear
    hidden_sizes = [16, 16]     # two layers (exercises both kernels); c = 8 channels each

    key = jax.random.PRNGKey(0)
    key, k_loc, k_st = jax.random.split(key, 3)
    locs = 2.0 * jax.random.uniform(k_loc, (B, N, 2), jnp.float32)
    states = jax.random.normal(k_st, (B, N, input_size, G_SIZE), jnp.float32)

    params = init_params(jax.random.PRNGKey(42), input_size, hidden_sizes)
    ref_p, ref_v = reference_forward(locs, states, params)

    # f32 operands: tight tolerance (validates the split-W / linearity collapse and the
    # fused head epilogue against the explicit per-message reference).
    packed_f32 = pack_params(params, operand_dtype=jnp.float32)
    pol32, val32 = basis_traffic_coordinator_forward(locs, states, packed_f32)
    pol32 = jax.block_until_ready(pol32)
    val32 = jax.block_until_ready(val32)
    assert pol32.shape == (B, N, N_ACTIONS) and val32.shape == (B, N, 1)
    assert jnp.allclose(pol32, ref_p, rtol=2e-3, atol=2e-3)
    assert jnp.allclose(val32, ref_v, rtol=2e-3, atol=2e-3)

    # bf16 operands / bf16 intermediates with f32 MXU accumulation: loose sanity bound.
    packed_bf16 = pack_params(params, operand_dtype=jnp.bfloat16)
    polbf, valbf = basis_traffic_coordinator_forward(locs, states, packed_bf16)
    polbf = jax.block_until_ready(polbf)
    valbf = jax.block_until_ready(valbf)
    assert jnp.allclose(polbf, ref_p, rtol=1e-1, atol=5e-1)
    assert jnp.allclose(valbf, ref_v, rtol=1e-1, atol=5e-1)

    print("KERNEL_OK")
</pallas_src>

<mosaic_0001>
module attributes {stable_mosaic.version = 11 : i64} {
  func.func @_graph_layer_kernel(%arg0: i32, %arg1: memref<8x128xf32, #tpu.memory_space<vmem>>, %arg2: memref<128x128xf32, #tpu.memory_space<vmem>>, %arg3: memref<8x128xf32, #tpu.memory_space<vmem>>, %arg4: memref<8x128xf32, #tpu.memory_space<vmem>>) attributes {dimension_semantics = [#tpu.dimension_semantics<parallel>], iteration_bounds = array<i64: 1>, scalar_prefetch = 0 : i64, scratch_operands = 0 : i64, tpu.core_type = #tpu.core_type<tc>, window_params = [{transform_indices = @transform_0, window_bounds = array<i64: 8, 128>}, {pipeline_mode = #tpu.pipeline_mode<synchronous>, transform_indices = @transform_1, window_bounds = array<i64: 128, 128>}, {transform_indices = @transform_2, window_bounds = array<i64: 8, 128>}, {transform_indices = @transform_3, window_bounds = array<i64: 8, 128>}]} {
    %c0 = arith.constant 0 : index
    %c0_0 = arith.constant 0 : index
    %0 = vector.load %arg1[%c0, %c0_0] : memref<8x128xf32, #tpu.memory_space<vmem>>, vector<8x128xf32>
    %c0_1 = arith.constant 0 : index
    %c0_2 = arith.constant 0 : index
    %1 = vector.load %arg2[%c0_1, %c0_2] : memref<128x128xf32, #tpu.memory_space<vmem>>, vector<128x128xf32>
    %cst = arith.constant dense<0.000000e+00> : vector<8x128xf32>
    %2 = tpu.matmul %0, %1, %cst {dimension_numbers = #tpu.dot_dimension_numbers<[1], [0], [0], [1], [0, 0, 1, 1], [], []>} : vector<8x128xf32>, vector<128x128xf32>, vector<8x128xf32> -> vector<8x128xf32>
    %cst_3 = arith.constant 4.000000e+00 : f32
    %3 = vector.broadcast %cst_3 : f32 to vector<8x128xf32>
    %4 = arith.mulf %3, %2 : vector<8x128xf32>
    %c0_4 = arith.constant 0 : index
    %c0_5 = arith.constant 0 : index
    %5 = vector.load %arg3[%c0_4, %c0_5] : memref<8x128xf32, #tpu.memory_space<vmem>>, vector<8x128xf32>
    %6 = arith.addf %4, %5 : vector<8x128xf32>
    %cst_6 = arith.constant 0.000000e+00 : f32
    %7 = vector.broadcast %cst_6 : f32 to vector<8x128xf32>
    %8 = arith.maximumf %6, %7 : vector<8x128xf32>
    %c0_7 = arith.constant 0 : index
    %c0_8 = arith.constant 0 : index
    %9 = vector.load %arg4[%c0_7, %c0_8] : memref<8x128xf32, #tpu.memory_space<vmem>>, vector<8x128xf32>
    tpu.vector_store %arg4[%c0_7, %c0_8], %8 {strides = array<i32>} : memref<8x128xf32, #tpu.memory_space<vmem>>, vector<8x128xf32>,
    return
  }
  func.func @transform_0(%arg0: i32) -> (i32, i32) {
    %c0_i32 = arith.constant 0 : i32
    %c0_i32_0 = arith.constant 0 : i32
    return %arg0, %c0_i32 : i32, i32
  }
  func.func @transform_1(%arg0: i32) -> (i32, i32) {
    %c0_i32 = arith.constant 0 : i32
    %c0_i32_0 = arith.constant 0 : i32
    %c0_i32_1 = arith.constant 0 : i32
    return %c0_i32, %c0_i32_0 : i32, i32
  }
  func.func @transform_2(%arg0: i32) -> (i32, i32) {
    %c0_i32 = arith.constant 0 : i32
    %c0_i32_0 = arith.constant 0 : i32
    return %arg0, %c0_i32 : i32, i32
  }
  func.func @transform_3(%arg0: i32) -> (i32, i32) {
    %c0_i32 = arith.constant 0 : i32
    %c0_i32_0 = arith.constant 0 : i32
    return %arg0, %c0_i32 : i32, i32
  }
}

</mosaic_0001>

<llo_original>
// kernel: tpu_custom_call.1
$region0: #{tpu_custom_call.1}
  #allocation0 [shape = 'u32[]', space=smem, size = 0x4, offset = 0x4, fixed_abs, tag = 'smem constant byte address 0x4 - core index']
  #allocation1 [shape = 'u32[72,128]{1,0:T(1,128)}', space=vmem, size = 0x9000, scoped, tag = 'internal scratch']
  %s0 = inlined_call_operand.hbm [shape: f32[8,128], index: 0, kind: input, shape index: {}]
  %s1 = inlined_call_operand.hbm [shape: f32[128,128], index: 1, kind: input, shape index: {}]
  %s2 = inlined_call_operand.hbm [shape: f32[8,128], index: 2, kind: input, shape index: {}]
  %s3 = inlined_call_operand.hbm [shape: f32[8,128], index: 3, kind: output, shape index: {}]
  %s4 = sld [smem:[#allocation0]]
  $region34: #{tpu_custom_call.1} parent=0
    _
  %s6 = ssub.s32 1, %s4
  %s7 = scalar_select 0, %s6, %s4
  $region1: #{tpu_custom_call.1} parent=0
    #allocation2 [shape = 'u8[4096]{0}', space=vmem, size = 0x1000, scoped, tag = 'input window, operand 0, single buffered']
    #allocation3 [shape = 's32[1]{0}', space=sflag, size = 0x4, scoped, tag = 'scoped memory for tpu_custom_call.1']
    #allocation4 [shape = 's32[1]{0}', space=sflag, size = 0x4, scoped, tag = 'scoped memory for tpu_custom_call.1']
    #allocation5 [shape = 'u8[65536]{0}', space=vmem, size = 0x10000, scoped, tag = 'input window, operand 1, single buffered']
    #allocation6 [shape = 's32[1]{0}', space=sflag, size = 0x4, scoped, tag = 'scoped memory for tpu_custom_call.1']
    #allocation7 [shape = 'u8[4096]{0}', space=vmem, size = 0x1000, scoped, tag = 'input window, operand 2, single buffered']
    #allocation8 [shape = 'u8[4096]{0}', space=vmem, size = 0x1000, scoped, tag = 'output window, operand 0, single buffered']
    %8 = vsyncpa [#allocation3], 0
    %9 = vsyncpa [#allocation6], 0
    %10 = vsyncpa [#allocation4], 0
    // Predicated region
    $region2: #{tpu_custom_call.1} parent=1 // pred_check
      _
    $region3: #{tpu_custom_call.1} parent=1 // pred_check_branch
      %12 = sbr.rel (0) target = $region5
    $region4: #{tpu_custom_call.1} parent=1 // pred_region
      %14 = vsyncadd [#allocation3], 0
      %s16 = sshll.u32 %s0, 4
      %s17 = int_to_ptr.hbm [resolvable:$true] %s16
      %s18 = sshll.u32 [#allocation2], 4
      %s19 = int_to_ptr.vmem [resolvable:$true] %s18
      %21 = dma.hbm_to_vmem [thread:$0]  %s17, 128, %s19, [#allocation3]
    $region5: #{tpu_custom_call.1} parent=1 // pred_fallthru
      _
    // Predicated region
    $region6: #{tpu_custom_call.1} parent=1 // pred_check
      _
    $region7: #{tpu_custom_call.1} parent=1 // pred_check_branch
      %23 = sbr.rel (0) target = $region9
    $region8: #{tpu_custom_call.1} parent=1 // pred_region
      %25 = vsyncadd [#allocation6], 0
      %s26 = sshll.u32 %s1, 4
      %s27 = int_to_ptr.hbm [resolvable:$true] %s26
      %s28 = sshll.u32 [#allocation5], 4
      %s29 = int_to_ptr.vmem [resolvable:$true] %s28
      %34 = dma.hbm_to_vmem [thread:$0]  %s27, 2048, %s29, [#allocation6], 128, 128, 8
    $region9: #{tpu_custom_call.1} parent=1 // pred_fallthru
      _
    // Predicated region
    $region10: #{tpu_custom_call.1} parent=1 // pred_check
      _
    $region11: #{tpu_custom_call.1} parent=1 // pred_check_branch
      %36 = sbr.rel (0) target = $region13
    $region12: #{tpu_custom_call.1} parent=1 // pred_region
      %38 = vsyncadd [#allocation6], 0
      %s40 = sshll.u32 %s2, 4
      %s41 = int_to_ptr.hbm [resolvable:$true] %s40
      %s42 = sshll.u32 [#allocation7], 4
      %s43 = int_to_ptr.vmem [resolvable:$true] %s42
      %45 = dma.hbm_to_vmem [thread:$0]  %s41, 128, %s43, [#allocation6]
    $region13: #{tpu_custom_call.1} parent=1 // pred_fallthru
      _
    // Predicated region
    $region14: #{tpu_custom_call.1} parent=1 // pred_check
      _
    $region15: #{tpu_custom_call.1} parent=1 // pred_check_branch
      %47 = sbr.rel (0) target = $region17
    $region16: #{tpu_custom_call.1} parent=1 // pred_region
      %49 = dma.done [#allocation3], 128
    $region17: #{tpu_custom_call.1} parent=1 // pred_fallthru
      _
    // Predicated region
    $region18: #{tpu_custom_call.1} parent=1 // pred_check
      _
    $region19: #{tpu_custom_call.1} parent=1 // pred_check_branch
      %51 = sbr.rel (0) target = $region21
    $region20: #{tpu_custom_call.1} parent=1 // pred_region
      %53 = dma.done [#allocation6], 2048
    $region21: #{tpu_custom_call.1} parent=1 // pred_fallthru
      _
    // Predicated region
    $region22: #{tpu_custom_call.1} parent=1 // pred_check
      _
    $region23: #{tpu_custom_call.1} parent=1 // pred_check_branch
      %55 = sbr.rel (0) target = $region25
    $region24: #{tpu_custom_call.1} parent=1 // pred_region
      %57 = dma.done [#allocation6], 128
    $region25: #{tpu_custom_call.1} parent=1 // pred_fallthru
      _
    %v58 = vld [vmem:[#allocation2] sm:$0xff]
    %v59 = vld [vmem:[#allocation5] sm:$0xff]
    %v60 = vld [vmem:[#allocation5 + $0x8] sm:$0xff]
    %v61 = vld [vmem:[#allocation5 + $0x10] sm:$0xff]
    %v62 = vld [vmem:[#allocation5 + $0x18] sm:$0xff]
    %v63 = vld [vmem:[#allocation5 + $0x20] sm:$0xff]
    %v64 = vld [vmem:[#allocation5 + $0x28] sm:$0xff]
    %v65 = vld [vmem:[#allocation5 + $0x30] sm:$0xff]
    %v66 = vld [vmem:[#allocation5 + $0x38] sm:$0xff]
    %v67 = vld [vmem:[#allocation5 + $0x40] sm:$0xff]
    %v68 = vld [vmem:[#allocation5 + $0x48] sm:$0xff]
    %v69 = vld [vmem:[#allocation5 + $0x50] sm:$0xff]
    %v70 = vld [vmem:[#allocation5 + $0x58] sm:$0xff]
    %v71 = vld [vmem:[#allocation5 + $0x60] sm:$0xff]
    %v72 = vld [vmem:[#allocation5 + $0x68] sm:$0xff]
    %v73 = vld [vmem:[#allocation5 + $0x70] sm:$0xff]
    %v74 = vld [vmem:[#allocation5 + $0x78] sm:$0xff]
    %75 = vmatpush.msra.mxu0 %v74
    %76 = vmatpush.msra.mxu0 %v73
    %77 = vmatpush.msra.mxu0 %v72
    %78 = vmatpush.msra.mxu0 %v71
    %79 = vmatpush.msra.mxu0 %v70
    %80 = vmatpush.msra.mxu0 %v69
    %81 = vmatpush.msra.mxu0 %v68
    %82 = vmatpush.msra.mxu0 %v67
    %83 = vmatpush.msra.mxu0 %v66
    %84 = vmatpush.msra.mxu0 %v65
    %85 = vmatpush.msra.mxu0 %v64
    %86 = vmatpush.msra.mxu0 %v63
    %87 = vmatpush.msra.mxu0 %v62
    %88 = vmatpush.msra.mxu0 %v61
    %89 = vmatpush.msra.mxu0 %v60
    %90 = vmatpush.msra.mxu0 %v59
    %91 = vmatmul.f32.gmra.mxu0 %v58
    %v92 = vpop.f32.mrf.mxu0
    %v93 = vadd.f32 0.0, %v92
    %94 = vdwg.mxu0
    %v95 = vmul.f32 %v93, 4.0
    %v96 = vld [vmem:[#allocation7] sm:$0xff]
    %v97 = vadd.f32 %v95, %v96
    %v98 = vmax.f32 %v97, 0.0
    %99 = vst [vmem:[#allocation8] sm:$0xff] %v98
    // Predicated region
    $region26: #{tpu_custom_call.1} parent=1 // pred_check
      _
    $region27: #{tpu_custom_call.1} parent=1 // pred_check_branch
      %101 = sbr.rel (0) target = $region29
    $region28: #{tpu_custom_call.1} parent=1 // pred_region
      %103 = vsyncadd [#allocation4], 0
      %s105 = sshll.u32 [#allocation8], 4
      %s106 = int_to_ptr.vmem [resolvable:$true] %s105
      %s107 = sshll.u32 %s3, 4
      %s108 = int_to_ptr.hbm [resolvable:$true] %s107
      %110 = dma.vmem_to_hbm [thread:$0]  %s106, 128, %s108, [#allocation4]
    $region29: #{tpu_custom_call.1} parent=1 // pred_fallthru
      _
    // Predicated region
    $region30: #{tpu_custom_call.1} parent=1 // pred_check
      _
    $region31: #{tpu_custom_call.1} parent=1 // pred_check_branch
      %112 = sbr.rel (0) target = $region33
    $region32: #{tpu_custom_call.1} parent=1 // pred_region
      %114 = dma.done [#allocation4], 128
    $region33: #{tpu_custom_call.1} parent=1 // pred_fallthru
      _
    %115 = vsyncpa [#allocation3], 1
    %116 = vsyncpa [#allocation6], 1
    %117 = vsyncpa [#allocation4], 1

</llo_original>
